<compile_context>
chip_gen: v7x
topology: tpu7x:2x2x1
jax: 0.10.0
libtpu: 0.0.40
codegen_flags: <defaults>
</compile_context>

<pallas_src>
import functools
from typing import NamedTuple, Optional

import jax
import jax.numpy as jnp
from jax.experimental import pallas as pl
from jax.experimental.pallas import tpu as pltpu


# --------------------------------------------------------------------------
# helpers
# --------------------------------------------------------------------------
def _round_up(v, m):
    return (v + m - 1) // m * m


def _pick_tile(padded_dim, cap, unit):
    """Largest tile <= cap (power-of-two descent) keeping pad overhead <=12.5%."""
    if padded_dim <= cap:
        return padded_dim
    c = cap
    while c > unit:
        if _round_up(padded_dim, c) - padded_dim <= padded_dim // 8:
            return c
        c //= 2
    return unit


def _tpu_config():
    """(vmem_bytes_per_core, tensorcores_per_chip) for the local TPU."""
    kind = ""
    try:
        kind = jax.devices()[0].device_kind.lower()
    except Exception:
        pass
    num_cores = 2 if "v7" in kind else 1
    vmem_bytes = None
    try:
        vmem_bytes = int(getattr(pltpu.get_tpu_info(), "vmem_capacity_bytes"))
    except Exception:
        vmem_bytes = None
    if vmem_bytes is None:
        # Conservative fallback: only assume 128 MiB on clearly-v5/v6 chips.
        vmem_bytes = (128 << 20) if ("v5" in kind or "v6" in kind) else (64 << 20)
    return vmem_bytes, num_cores


def _weight_spec(block_shape, index_map, deep_buffer):
    """Weight BlockSpec; request 3-deep pipelining on the HBM-bound path."""
    if deep_buffer:
        try:
            return pl.BlockSpec(block_shape, index_map,
                                pipeline_mode=pl.Buffered(3))
        except TypeError:
            pass
    return pl.BlockSpec(block_shape, index_map)


def _vmem_bytes_needed(tm, tk, tn, k_tiled, has_bias, out_itemsize, w_bufs):
    x_b = tm * tk * 2 * 2                      # bf16 x, double-buffered
    w_b = tk * tn * 1 * w_bufs                 # int8 W
    o_b = tm * tn * out_itemsize * 2           # output, double-buffered
    acc_b = tm * tn * 4 if k_tiled else 0      # f32 accumulator scratch
    bias_b = tn * 4 * 2 if has_bias else 0
    temp_b = tk * tn * 2 + tm * tn * 4         # bf16 W-cast temp + f32 result
    return x_b + w_b + o_b + acc_b + bias_b + temp_b


# --------------------------------------------------------------------------
# kernels
# --------------------------------------------------------------------------
def _qlinear_kernel_single_k(scale_ref, *refs, has_bias):
    """Fast path: whole K fits one tile -> no accumulator, no init/epilogue."""
    if has_bias:
        x_ref, w_ref, b_ref, o_ref = refs
    else:
        x_ref, w_ref, o_ref = refs
        b_ref = None
    # x is already bf16 (wrapper cast); int8 -> bf16 dequant is exact.
    y = jnp.dot(x_ref[...], w_ref[...].astype(jnp.bfloat16),
                preferred_element_type=jnp.float32)
    y = y * scale_ref[0]
    if b_ref is not None:
        y = y + b_ref[...]
    o_ref[...] = y.astype(o_ref.dtype)


def _qlinear_kernel_acc(scale_ref, *refs, has_bias):
    """K-tiled path: f32 VMEM accumulator with init/epilogue gating."""
    if has_bias:
        x_ref, w_ref, b_ref, o_ref, acc_ref = refs
    else:
        x_ref, w_ref, o_ref, acc_ref = refs
        b_ref = None

    k = pl.program_id(2)

    @pl.when(k == 0)
    def _():
        acc_ref[...] = jnp.zeros_like(acc_ref)

    acc_ref[...] += jnp.dot(x_ref[...], w_ref[...].astype(jnp.bfloat16),
                            preferred_element_type=jnp.float32)

    @pl.when(k == pl.num_programs(2) - 1)
    def _():
        y = acc_ref[...] * scale_ref[0]
        if b_ref is not None:
            y = y + b_ref[...]
        o_ref[...] = y.astype(o_ref.dtype)


# --------------------------------------------------------------------------
# wrapper: one-time init (weight layout) + per-call forward
# --------------------------------------------------------------------------
class QLinearParams(NamedTuple):
    w_kn: jax.Array            # (Kp, Np) int8, pre-transposed + padded at init
    scale: jax.Array           # (1,) f32
    bias: Optional[jax.Array]  # (1, Np) f32 or None
    in_features: int
    out_features: int
    tk: int
    tn: int
    vmem_bytes: int
    num_cores: int


def qlinear_init(int8_weights, int8_scales, bias=None):
    """One-time weight prep (PyTorch __init__ analogue).

    int8_weights: (N, K) int8 in nn.Linear layout
    int8_scales:  scalar / (1,) quantization scale
    bias:         (1, N) optional
    """
    N, K = int8_weights.shape
    vmem_bytes, num_cores = _tpu_config()
    big_vmem = vmem_bytes >= (96 << 20)         # v5e/v6e (128 MiB) vs v7x (64 MiB)

    k128 = _round_up(K, 128)
    n128 = _round_up(N, 128)
    tk = _pick_tile(k128, 4096, 128)            # full K when K <= 4096
    tn = _pick_tile(n128, 1024 if big_vmem else 512, 128)
    Kp, Np = _round_up(k128, tk), _round_up(n128, tn)

    # One-time transpose to (K, N) + pad to tile multiples: the forward never
    # touches the weight layout again.
    w_kn = jnp.transpose(int8_weights)
    if (Kp, Np) != (K, N):
        w_kn = jnp.pad(w_kn, ((0, Kp - K), (0, Np - N)))

    scale = jnp.reshape(int8_scales, (1,)).astype(jnp.float32)

    b = None
    if bias is not None:
        b = jnp.reshape(bias, (1, N)).astype(jnp.float32)
        if Np != N:
            b = jnp.pad(b, ((0, 0), (0, Np - N)))

    return QLinearParams(w_kn=w_kn, scale=scale, bias=b,
                         in_features=K, out_features=N, tk=tk, tn=tn,
                         vmem_bytes=vmem_bytes, num_cores=num_cores)


def qlinear_apply(params, x):
    """Forward pass: y = (x @ W^T) * scale (+ bias).  x: (M, K)."""
    M, K = x.shape
    assert K == params.in_features, "weight in_features mismatch"
    out_dtype = x.dtype
    out_itemsize = jnp.dtype(out_dtype).itemsize

    Kp, Np = params.w_kn.shape
    tk, tn = params.tk, params.tn
    N = params.out_features
    big_vmem = params.vmem_bytes >= (96 << 20)

    # M tile: exploit 128 MiB VMEM on v5e/v6e with bigger tm; cap on v7x.
    m8 = _round_up(M, 8)
    tm = _pick_tile(m8, 512 if big_vmem else 256, 8)
    Mp = _round_up(m8, tm)
    m_blocks = Mp // tm

    # Megacore N-split: only useful on 2-TensorCore chips (v7x) and only when
    # the whole problem would otherwise be a single (M, N) block.
    if params.num_cores >= 2 and m_blocks == 1 and Np // tn == 1 and Np % 256 == 0:
        tn = Np // 2
    n_blocks = Np // tn
    k_blocks = Kp // tk
    k_tiled = k_blocks > 1

    # Cast activations to bf16 ONCE here (halves x DMA bytes on every
    # (j, k) re-stream; removes the in-kernel VPU cast). int8->bf16 W cast
    # stays in-kernel; MXU runs the native bf16 x bf16 -> f32 path.
    xp = x.astype(jnp.bfloat16)
    if (Mp, Kp) != (M, K):
        xp = jnp.pad(xp, ((0, Mp - M), (0, Kp - K)))

    has_bias = params.bias is not None
    inputs = [params.scale, xp, params.w_kn]
    if has_bias:
        inputs.append(params.bias)

    # Deeper weight buffering only when the weight stream is long enough
    # (HBM-bound small-batch regime).
    deep_buffer = (m_blocks == 1) and (n_blocks * k_blocks >= 3)
    w_bufs = 3 if deep_buffer else 2

    if k_tiled:
        grid = (m_blocks, n_blocks, k_blocks)
        in_specs = [
            pl.BlockSpec((tm, tk), lambda i, j, k, s: (i, k)),
            _weight_spec((tk, tn), lambda i, j, k, s: (k, j), deep_buffer),
        ]
        if has_bias:
            in_specs.append(pl.BlockSpec((1, tn), lambda i, j, k, s: (0, j)))
        out_spec = pl.BlockSpec((tm, tn), lambda i, j, k, s: (i, j))
        scratch = [pltpu.VMEM((tm, tn), jnp.float32)]
        kernel = functools.partial(_qlinear_kernel_acc, has_bias=has_bias)
        dim_sem = ("parallel", "parallel", "arbitrary")
    else:
        grid = (m_blocks, n_blocks)
        in_specs = [
            pl.BlockSpec((tm, Kp), lambda i, j, s: (i, 0)),
            _weight_spec((Kp, tn), lambda i, j, s: (0, j), deep_buffer),
        ]
        if has_bias:
            in_specs.append(pl.BlockSpec((1, tn), lambda i, j, s: (0, j)))
        out_spec = pl.BlockSpec((tm, tn), lambda i, j, s: (i, j))
        scratch = []
        kernel = functools.partial(_qlinear_kernel_single_k, has_bias=has_bias)
        dim_sem = ("parallel", "parallel")

    # Right-size the scoped VMEM claim from the actual tile footprint.
    needed = _vmem_bytes_needed(tm, tk, tn, k_tiled, has_bias,
                                out_itemsize, w_bufs)
    vmem_limit = int(min(params.vmem_bytes * 3 // 4,
                         max(2 * needed, 16 << 20)))

    out = pl.pallas_call(
        kernel,
        out_shape=jax.ShapeDtypeStruct((Mp, Np), out_dtype),
        grid_spec=pltpu.PrefetchScalarGridSpec(
            num_scalar_prefetch=1,                 # quant scale -> SMEM
            grid=grid,
            in_specs=in_specs,
            out_specs=out_spec,
            scratch_shapes=scratch,
        ),
        compiler_params=pltpu.CompilerParams(
            dimension_semantics=dim_sem,
            vmem_limit_bytes=vmem_limit,
        ),
    )(*inputs)

    if Mp != M or Np != N:
        out = out[:M, :N]
    return out


def qlinear(x, int8_weights, int8_scales, bias=None):
    """Convenience one-shot wrapper (pays the weight prep on every call;
    prefer qlinear_init + qlinear_apply in real use)."""
    return qlinear_apply(qlinear_init(int8_weights, int8_scales, bias), x)


# --------------------------------------------------------------------------
# demo / self-test
# --------------------------------------------------------------------------
if __name__ == "__main__":
    # Small shapes implied by the forward: x (batch, in_features).
    batch, in_features, out_features = 8, 256, 512
    use_bias = True

    key = jax.random.PRNGKey(0)
    kx, kw, ks, kb = jax.random.split(key, 4)

    x = jax.random.normal(kx, (batch, in_features), dtype=jnp.float32)
    int8_weights = jax.random.randint(
        kw, (out_features, in_features), -128, 128, dtype=jnp.int8)
    int8_scales = jax.random.normal(ks, (1,), dtype=jnp.float32)
    bias = (jax.random.normal(kb, (1, out_features), dtype=jnp.float32)
            if use_bias else None)

    # One-time weight prep (init), then the forward.
    params = qlinear_init(int8_weights, int8_scales, bias)
    out = qlinear_apply(params, x)
    out = jax.block_until_ready(out)

    # Pure-JAX f32 reference of the PyTorch forward.
    w_f32 = int8_weights.astype(jnp.float32)
    ref = jnp.dot(x, w_f32.T) * int8_scales[0]
    if bias is not None:
        ref = ref + bias

    assert out.shape == (batch, out_features)
    assert out.dtype == x.dtype
    # Kernel feeds the MXU bf16 activations (int8->bf16 weight cast is exact),
    # so compare with a relative-to-max-magnitude tolerance.
    rel_err = float(jnp.max(jnp.abs(out - ref)) /
                    (jnp.max(jnp.abs(ref)) + 1e-6))
    assert rel_err < 1e-2, f"mismatch vs reference: rel_err={rel_err}"
    print("KERNEL_OK")
</pallas_src>

<mosaic_0001>
module attributes {stable_mosaic.version = 11 : i64} {
  func.func @_qlinear_kernel_single_k(%arg0: i32, %arg1: i32, %arg2: memref<1xf32, #tpu.memory_space<smem>>, %arg3: memref<8x256xbf16, #tpu.memory_space<vmem>>, %arg4: memref<256x512xi8, #tpu.memory_space<vmem>>, %arg5: memref<1x512xf32, #tpu.memory_space<vmem>>, %arg6: memref<8x512xf32, #tpu.memory_space<vmem>>) attributes {dimension_semantics = [#tpu.dimension_semantics<parallel>, #tpu.dimension_semantics<parallel>], iteration_bounds = array<i64: 1, 1>, scalar_prefetch = 1 : i64, scratch_operands = 0 : i64, tpu.core_type = #tpu.core_type<tc>, window_params = [{transform_indices = @transform_0, window_bounds = array<i64: 8, 256>}, {transform_indices = @transform_1, window_bounds = array<i64: 256, 512>}, {transform_indices = @transform_2, window_bounds = array<i64: 1, 512>}, {transform_indices = @transform_3, window_bounds = array<i64: 8, 512>}]} {
    %c0 = arith.constant 0 : index
    %c0_0 = arith.constant 0 : index
    %0 = vector.load %arg3[%c0, %c0_0] : memref<8x256xbf16, #tpu.memory_space<vmem>>, vector<8x256xbf16>
    %c0_1 = arith.constant 0 : index
    %c0_2 = arith.constant 0 : index
    %1 = vector.load %arg4[%c0_1, %c0_2] : memref<256x512xi8, #tpu.memory_space<vmem>>, vector<256x512xi8>
    %2 = arith.sitofp %1 : vector<256x512xi8> to vector<256x512xbf16>
    %cst = arith.constant dense<0.000000e+00> : vector<8x512xf32>
    %3 = tpu.matmul %0, %2, %cst {dimension_numbers = #tpu.dot_dimension_numbers<[1], [0], [0], [1], [0, 0, 1, 1], [], []>} : vector<8x256xbf16>, vector<256x512xbf16>, vector<8x512xf32> -> vector<8x512xf32>
    %c0_3 = arith.constant 0 : index
    %4 = memref.load %arg2[%c0_3] : memref<1xf32, #tpu.memory_space<smem>>
    %5 = vector.broadcast %4 : f32 to vector<8x512xf32>
    %6 = arith.mulf %3, %5 : vector<8x512xf32>
    %c0_4 = arith.constant 0 : index
    %c0_5 = arith.constant 0 : index
    %7 = vector.load %arg5[%c0_4, %c0_5] : memref<1x512xf32, #tpu.memory_space<vmem>>, vector<1x512xf32>
    %8 = vector.broadcast %7 : vector<1x512xf32> to vector<8x512xf32>
    %9 = arith.addf %6, %8 : vector<8x512xf32>
    %c0_6 = arith.constant 0 : index
    %c0_7 = arith.constant 0 : index
    %10 = vector.load %arg6[%c0_6, %c0_7] : memref<8x512xf32, #tpu.memory_space<vmem>>, vector<8x512xf32>
    tpu.vector_store %arg6[%c0_6, %c0_7], %9 {strides = array<i32>} : memref<8x512xf32, #tpu.memory_space<vmem>>, vector<8x512xf32>,
    return
  }
  func.func @transform_0(%arg0: i32, %arg1: i32, %arg2: memref<1xf32, #tpu.memory_space<smem>>) -> (i32, i32) {
    %c0_i32 = arith.constant 0 : i32
    %c0_i32_0 = arith.constant 0 : i32
    return %arg0, %c0_i32 : i32, i32
  }
  func.func @transform_1(%arg0: i32, %arg1: i32, %arg2: memref<1xf32, #tpu.memory_space<smem>>) -> (i32, i32) {
    %c0_i32 = arith.constant 0 : i32
    %c0_i32_0 = arith.constant 0 : i32
    return %c0_i32, %arg1 : i32, i32
  }
  func.func @transform_2(%arg0: i32, %arg1: i32, %arg2: memref<1xf32, #tpu.memory_space<smem>>) -> (i32, i32) {
    %c0_i32 = arith.constant 0 : i32
    %c0_i32_0 = arith.constant 0 : i32
    return %c0_i32, %arg1 : i32, i32
  }
  func.func @transform_3(%arg0: i32, %arg1: i32, %arg2: memref<1xf32, #tpu.memory_space<smem>>) -> (i32, i32) {
    %c0_i32 = arith.constant 0 : i32
    return %arg0, %arg1 : i32, i32
  }
}

</mosaic_0001>

<llo_original>
// kernel: tpu_custom_call.1
$region0: #{tpu_custom_call.1}
  #allocation0 [shape = 'u32[]', space=smem, size = 0x4, offset = 0x4, fixed_abs, tag = 'smem constant byte address 0x4 - core index']
  #allocation1 [shape = 'u32[144,128]{1,0:T(1,128)}', space=vmem, size = 0x12000, scoped, tag = 'internal scratch']
  #allocation2 [shape = 's32[1]{0}', space=sflag, size = 0x4, scoped, tag = 'scoped memory for tpu_custom_call.1']
  #allocation3 [shape = 'f32[1]{0:T(128)S(6)}', space=smem, size = 0x200, scoped, tag = 'prefetched SMEM operand 0']
  %s0 = inlined_call_operand.<no memory space> [shape: f32[1], index: 0, kind: input, shape index: {}]
  %s1 = inlined_call_operand.hbm [shape: bf16[8,256], index: 1, kind: input, shape index: {}]
  %s2 = inlined_call_operand.hbm [shape: s8[256,512], index: 2, kind: input, shape index: {}]
  %s3 = inlined_call_operand.vmem [shape: f32[1,512], index: 3, kind: input, shape index: {}]
  %s4 = inlined_call_operand.hbm [shape: f32[8,512], index: 4, kind: output, shape index: {}]
  %s5 = sld [smem:[#allocation0]]
  $region30: #{tpu_custom_call.1} parent=0
    _
  %s7 = ssub.s32 1, %s5
  %s8 = scalar_select 0, %s7, %s5
  %9 = sst [smem:[#allocation3]] %s0
  $region1: #{tpu_custom_call.1} parent=0
    #allocation4 [shape = 'u8[4096]{0}', space=vmem, size = 0x1000, scoped, tag = 'input window, operand 1, single buffered']
    #allocation5 [shape = 's32[1]{0}', space=sflag, size = 0x4, scoped, tag = 'scoped memory for tpu_custom_call.1']
    #allocation6 [shape = 's32[1]{0}', space=sflag, size = 0x4, scoped, tag = 'scoped memory for tpu_custom_call.1']
    #allocation7 [shape = 'u8[131072]{0}', space=vmem, size = 0x20000, scoped, tag = 'input window, operand 2, single buffered']
    #allocation8 [shape = 's32[1]{0}', space=sflag, size = 0x4, scoped, tag = 'scoped memory for tpu_custom_call.1']
    #allocation9 [shape = 'u8[16384]{0}', space=vmem, size = 0x4000, scoped, tag = 'output window, operand 0, single buffered']
    %10 = vsyncpa [#allocation5], 0
    %11 = vsyncpa [#allocation8], 0
    %12 = vsyncpa [#allocation6], 0
    // Predicated region
    $region2: #{tpu_custom_call.1} parent=1 // pred_check
      _
    $region3: #{tpu_custom_call.1} parent=1 // pred_check_branch
      %14 = sbr.rel (0) target = $region5
    $region4: #{tpu_custom_call.1} parent=1 // pred_region
      %s16 = ssub.s32 128, 128
      %17 = vsyncadd [#allocation5], %s16
      %s19 = sshll.u32 [#allocation4], 4
      %s20 = int_to_ptr.vmem [resolvable:$true] %s19
      %22 = dma.hbm_to_vmem [thread:$0]  %s1, 128, %s20, [#allocation5]
    $region5: #{tpu_custom_call.1} parent=1 // pred_fallthru
      _
    // Predicated region
    $region6: #{tpu_custom_call.1} parent=1 // pred_check
      _
    $region7: #{tpu_custom_call.1} parent=1 // pred_check_branch
      %24 = sbr.rel (0) target = $region9
    $region8: #{tpu_custom_call.1} parent=1 // pred_region
      %s26 = ssub.s32 4096, 4096
      %27 = vsyncadd [#allocation8], %s26
      %s28 = sshll.u32 [#allocation7], 4
      %s29 = int_to_ptr.vmem [resolvable:$true] %s28
      %34 = dma.hbm_to_vmem [thread:$0]  %s2, 4096, %s29, [#allocation8], 512, 512, 32
    $region9: #{tpu_custom_call.1} parent=1 // pred_fallthru
      _
    // Predicated region
    $region10: #{tpu_custom_call.1} parent=1 // pred_check
      _
    $region11: #{tpu_custom_call.1} parent=1 // pred_check_branch
      %36 = sbr.rel (0) target = $region13
    $region12: #{tpu_custom_call.1} parent=1 // pred_region
      _
    $region13: #{tpu_custom_call.1} parent=1 // pred_fallthru
      _
    // Predicated region
    $region14: #{tpu_custom_call.1} parent=1 // pred_check
      _
    $region15: #{tpu_custom_call.1} parent=1 // pred_check_branch
      %38 = sbr.rel (0) target = $region17
    $region16: #{tpu_custom_call.1} parent=1 // pred_region
      %39 = dma.done [#allocation5], 128
    $region17: #{tpu_custom_call.1} parent=1 // pred_fallthru
      _
    // Predicated region
    $region18: #{tpu_custom_call.1} parent=1 // pred_check
      _
    $region19: #{tpu_custom_call.1} parent=1 // pred_check_branch
      %41 = sbr.rel (0) target = $region21
    $region20: #{tpu_custom_call.1} parent=1 // pred_region
      %42 = dma.done [#allocation8], 4096
    $region21: #{tpu_custom_call.1} parent=1 // pred_fallthru
      _
    %v43 = vld [vmem:[#allocation4] sm:$0xff]
    %v44 = vld [vmem:[#allocation7] sm:$0xff]
    %v45 = vld [vmem:[#allocation7 + $0x8] sm:$0xff]
    %v46 = vld [vmem:[#allocation7 + $0x10] sm:$0xff]
    %v47 = vld [vmem:[#allocation7 + $0x18] sm:$0xff]
    %v48 = vld [vmem:[#allocation7 + $0x20] sm:$0xff]
    %v49 = vld [vmem:[#allocation7 + $0x28] sm:$0xff]
    %v50 = vld [vmem:[#allocation7 + $0x30] sm:$0xff]
    %v51 = vld [vmem:[#allocation7 + $0x38] sm:$0xff]
    %v52 = vld [vmem:[#allocation7 + $0x40] sm:$0xff]
    %v53 = vld [vmem:[#allocation7 + $0x48] sm:$0xff]
    %v54 = vld [vmem:[#allocation7 + $0x50] sm:$0xff]
    %v55 = vld [vmem:[#allocation7 + $0x58] sm:$0xff]
    %v56 = vld [vmem:[#allocation7 + $0x60] sm:$0xff]
    %v57 = vld [vmem:[#allocation7 + $0x68] sm:$0xff]
    %v58 = vld [vmem:[#allocation7 + $0x70] sm:$0xff]
    %v59 = vld [vmem:[#allocation7 + $0x78] sm:$0xff]
    %v60 = vld [vmem:[#allocation7 + $0x80] sm:$0xff]
    %v61 = vld [vmem:[#allocation7 + $0x88] sm:$0xff]
    %v62 = vld [vmem:[#allocation7 + $0x90] sm:$0xff]
    %v63 = vld [vmem:[#allocation7 + $0x98] sm:$0xff]
    %v64 = vld [vmem:[#allocation7 + $0xa0] sm:$0xff]
    %v65 = vld [vmem:[#allocation7 + $0xa8] sm:$0xff]
    %v66 = vld [vmem:[#allocation7 + $0xb0] sm:$0xff]
    %v67 = vld [vmem:[#allocation7 + $0xb8] sm:$0xff]
    %v68 = vld [vmem:[#allocation7 + $0xc0] sm:$0xff]
    %v69 = vld [vmem:[#allocation7 + $0xc8] sm:$0xff]
    %v70 = vld [vmem:[#allocation7 + $0xd0] sm:$0xff]
    %v71 = vld [vmem:[#allocation7 + $0xd8] sm:$0xff]
    %v72 = vld [vmem:[#allocation7 + $0xe0] sm:$0xff]
    %v73 = vld [vmem:[#allocation7 + $0xe8] sm:$0xff]
    %v74 = vld [vmem:[#allocation7 + $0xf0] sm:$0xff]
    %v75 = vld [vmem:[#allocation7 + $0xf8] sm:$0xff]
    %v76 = vunpack.c.l.s8.bf16 %v44
    %v77 = vunpack.c.l.s8.bf16 %v45
    %v78 = vunpack.c.l.s8.bf16 %v46
    %v79 = vunpack.c.l.s8.bf16 %v47
    %v80 = vunpack.c.h.s8.bf16 %v44
    %v81 = vunpack.c.h.s8.bf16 %v45
    %v82 = vunpack.c.h.s8.bf16 %v46
    %v83 = vunpack.c.h.s8.bf16 %v47
    %v84 = vunpack.c.l.s8.bf16 %v48
    %v85 = vunpack.c.l.s8.bf16 %v49
    %v86 = vunpack.c.l.s8.bf16 %v50
    %v87 = vunpack.c.l.s8.bf16 %v51
    %v88 = vunpack.c.h.s8.bf16 %v48
    %v89 = vunpack.c.h.s8.bf16 %v49
    %v90 = vunpack.c.h.s8.bf16 %v50
    %v91 = vunpack.c.h.s8.bf16 %v51
    %v92 = vunpack.c.l.s8.bf16 %v52
    %v93 = vunpack.c.l.s8.bf16 %v53
    %v94 = vunpack.c.l.s8.bf16 %v54
    %v95 = vunpack.c.l.s8.bf16 %v55
    %v96 = vunpack.c.h.s8.bf16 %v52
    %v97 = vunpack.c.h.s8.bf16 %v53
    %v98 = vunpack.c.h.s8.bf16 %v54
    %v99 = vunpack.c.h.s8.bf16 %v55
    %v100 = vunpack.c.l.s8.bf16 %v56
    %v101 = vunpack.c.l.s8.bf16 %v57
    %v102 = vunpack.c.l.s8.bf16 %v58
    %v103 = vunpack.c.l.s8.bf16 %v59
    %v104 = vunpack.c.h.s8.bf16 %v56
    %v105 = vunpack.c.h.s8.bf16 %v57
    %v106 = vunpack.c.h.s8.bf16 %v58
    %v107 = vunpack.c.h.s8.bf16 %v59
    %v108 = vunpack.c.l.s8.bf16 %v60
    %v109 = vunpack.c.l.s8.bf16 %v61
    %v110 = vunpack.c.l.s8.bf16 %v62
    %v111 = vunpack.c.l.s8.bf16 %v63
    %v112 = vunpack.c.h.s8.bf16 %v60
    %v113 = vunpack.c.h.s8.bf16 %v61
    %v114 = vunpack.c.h.s8.bf16 %v62
    %v115 = vunpack.c.h.s8.bf16 %v63
    %v116 = vunpack.c.l.s8.bf16 %v64
    %v117 = vunpack.c.l.s8.bf16 %v65
    %v118 = vunpack.c.l.s8.bf16 %v66
    %v119 = vunpack.c.l.s8.bf16 %v67
    %v120 = vunpack.c.h.s8.bf16 %v64
    %v121 = vunpack.c.h.s8.bf16 %v65
    %v122 = vunpack.c.h.s8.bf16 %v66
    %v123 = vunpack.c.h.s8.bf16 %v67
    %v124 = vunpack.c.l.s8.bf16 %v68
    %v125 = vunpack.c.l.s8.bf16 %v69
    %v126 = vunpack.c.l.s8.bf16 %v70
    %v127 = vunpack.c.l.s8.bf16 %v71
    %v128 = vunpack.c.h.s8.bf16 %v68
    %v129 = vunpack.c.h.s8.bf16 %v69
    %v130 = vunpack.c.h.s8.bf16 %v70
    %v131 = vunpack.c.h.s8.bf16 %v71
    %v132 = vunpack.c.l.s8.bf16 %v72
    %v133 = vunpack.c.l.s8.bf16 %v73
    %v134 = vunpack.c.l.s8.bf16 %v74
    %v135 = vunpack.c.l.s8.bf16 %v75
    %v136 = vunpack.c.h.s8.bf16 %v72
    %v137 = vunpack.c.h.s8.bf16 %v73
    %v138 = vunpack.c.h.s8.bf16 %v74
    %v139 = vunpack.c.h.s8.bf16 %v75
    %v141 = vunpack.c.l.b16 %v43
    %v142 = vunpack.c.h.b16 %v43
    %v143 = vpack.c.b16 %v141, %v141
    %v144 = vpack.c.b16 %v142, %v142
    %147 = vmatprep.subr.bf16.mxu0 %v77
    %148 = vmatpush1.bf16.msra.mxu0 %v76
    %149 = vmatprep.subr.bf16.mxu0 %v81
    %150 = vmatpush1.bf16.msra.mxu0 %v80
    %151 = vmatprep.subr.bf16.mxu0 %v85
    %152 = vmatpush1.bf16.msra.mxu0 %v84
    %153 = vmatprep.subr.bf16.mxu0 %v89
    %154 = vmatpush1.bf16.msra.mxu0 %v88
    %155 = vmatprep.subr.bf16.mxu0 %v93
    %156 = vmatpush1.bf16.msra.mxu0 %v92
    %157 = vmatprep.subr.bf16.mxu0 %v97
    %158 = vmatpush1.bf16.msra.mxu0 %v96
    %159 = vmatprep.subr.bf16.mxu0 %v101
    %160 = vmatpush1.bf16.msra.mxu0 %v100
    %161 = vmatprep.subr.bf16.mxu0 %v105
    %162 = vmatpush1.bf16.msra.mxu0 %v104
    %163 = vmatprep.subr.bf16.mxu0 %v109
    %164 = vmatpush1.bf16.msra.mxu0 %v108
    %165 = vmatprep.subr.bf16.mxu0 %v113
    %166 = vmatpush1.bf16.msra.mxu0 %v112
    %167 = vmatprep.subr.bf16.mxu0 %v117
    %168 = vmatpush1.bf16.msra.mxu0 %v116
    %169 = vmatprep.subr.bf16.mxu0 %v121
    %170 = vmatpush1.bf16.msra.mxu0 %v120
    %171 = vmatprep.subr.bf16.mxu0 %v125
    %172 = vmatpush1.bf16.msra.mxu0 %v124
    %173 = vmatprep.subr.bf16.mxu0 %v129
    %174 = vmatpush1.bf16.msra.mxu0 %v128
    %175 = vmatprep.subr.bf16.mxu0 %v133
    %176 = vmatpush1.bf16.msra.mxu0 %v132
    %177 = vmatprep.subr.bf16.mxu0 %v137
    %178 = vmatpush1.bf16.msra.mxu0 %v136
    %179 = vmatprep.mubr.bf16.mxu0 %v144
    %180 = vmatmul.mubr.bf16.gmra.mrb[0].mxu0 %v143
    %v181 = vpop.f32.mrb[0].mxu0
    %v182 = vadd.f32 0.0, %v181
    %v183 = vpop.f32.mrb[0].mxu0
    %v184 = vadd.f32 0.0, %v183
    %v185 = vpop.f32.mrb[0].mxu0
    %v186 = vpop.f32.mrb[0].mxu0
    %187 = vdwg.mxu0
    %188 = vmatprep.subr.bf16.mxu0 %v79
    %189 = vmatpush1.bf16.msra.mxu0 %v78
    %190 = vmatprep.subr.bf16.mxu0 %v83
    %191 = vmatpush1.bf16.msra.mxu0 %v82
    %192 = vmatprep.subr.bf16.mxu0 %v87
    %193 = vmatpush1.bf16.msra.mxu0 %v86
    %194 = vmatprep.subr.bf16.mxu0 %v91
    %195 = vmatpush1.bf16.msra.mxu0 %v90
    %196 = vmatprep.subr.bf16.mxu0 %v95
    %197 = vmatpush1.bf16.msra.mxu0 %v94
    %198 = vmatprep.subr.bf16.mxu0 %v99
    %199 = vmatpush1.bf16.msra.mxu0 %v98
    %200 = vmatprep.subr.bf16.mxu0 %v103
    %201 = vmatpush1.bf16.msra.mxu0 %v102
    %202 = vmatprep.subr.bf16.mxu0 %v107
    %203 = vmatpush1.bf16.msra.mxu0 %v106
    %204 = vmatprep.subr.bf16.mxu0 %v111
    %205 = vmatpush1.bf16.msra.mxu0 %v110
    %206 = vmatprep.subr.bf16.mxu0 %v115
    %207 = vmatpush1.bf16.msra.mxu0 %v114
    %208 = vmatprep.subr.bf16.mxu0 %v119
    %209 = vmatpush1.bf16.msra.mxu0 %v118
    %210 = vmatprep.subr.bf16.mxu0 %v123
    %211 = vmatpush1.bf16.msra.mxu0 %v122
    %212 = vmatprep.subr.bf16.mxu0 %v127
    %213 = vmatpush1.bf16.msra.mxu0 %v126
    %214 = vmatprep.subr.bf16.mxu0 %v131
    %215 = vmatpush1.bf16.msra.mxu0 %v130
    %216 = vmatprep.subr.bf16.mxu0 %v135
    %217 = vmatpush1.bf16.msra.mxu0 %v134
    %218 = vmatprep.subr.bf16.mxu0 %v139
    %219 = vmatpush1.bf16.msra.mxu0 %v138
    %220 = vmatprep.mubr.bf16.mxu0 %v144
    %221 = vmatmul.mubr.bf16.gmra.mrb[0].mxu0 %v143
    %v222 = vpop.f32.mrb[0].mxu0
    %v223 = vadd.f32 0.0, %v222
    %v224 = vpop.f32.mrb[0].mxu0
    %v225 = vadd.f32 0.0, %v224
    %v226 = vpop.f32.mrb[0].mxu0
    %v227 = vpop.f32.mrb[0].mxu0
    %228 = vdwg.mxu0
    %s229 = sld [smem:[#allocation3]]
    %v230 = vstv %s229
    %v231 = vmul.f32 %v182, %v230
    %v232 = vmul.f32 %v184, %v230
    %v233 = vmul.f32 %v223, %v230
    %v234 = vmul.f32 %v225, %v230
    %v235 = vld [vmem:[%s3] sm:$0xf]
    %v237 = vlaneseq
    %v238 = vshrl.u32 %v237, 7
    %v239 = vsub.s32 0, %v238
    %v240 = vrot.slane %v235, %v239
    %v241 = vlaneseq
    %v242 = vshrl.u32 %v241, 7
    %v243 = vsub.s32 1, %v242
    %v244 = vrot.slane %v235, %v243
    %v245 = vlaneseq
    %v246 = vshrl.u32 %v245, 7
    %v247 = vsub.s32 2, %v246
    %v248 = vrot.slane %v235, %v247
    %v249 = vlaneseq
    %v250 = vshrl.u32 %v249, 7
    %v251 = vsub.s32 3, %v250
    %v252 = vrot.slane %v235, %v251
    %v257 = vadd.f32 %v231, %v240
    %v258 = vadd.f32 %v232, %v244
    %v259 = vadd.f32 %v233, %v248
    %v260 = vadd.f32 %v234, %v252
    %261 = vst [vmem:[#allocation9] sm:$0xff] %v257
    %262 = vst [vmem:[#allocation9 + $0x8] sm:$0xff] %v258
    %263 = vst [vmem:[#allocation9 + $0x10] sm:$0xff] %v259
    %264 = vst [vmem:[#allocation9 + $0x18] sm:$0xff] %v260
    // Predicated region
    $region22: #{tpu_custom_call.1} parent=1 // pred_check
      _
    $region23: #{tpu_custom_call.1} parent=1 // pred_check_branch
      %266 = sbr.rel (0) target = $region25
    $region24: #{tpu_custom_call.1} parent=1 // pred_region
      %s268 = ssub.s32 512, 512
      %269 = vsyncadd [#allocation6], %s268
      %s271 = sshll.u32 [#allocation9], 4
      %s272 = int_to_ptr.vmem [resolvable:$true] %s271
      %274 = dma.vmem_to_hbm [thread:$0]  %s272, 512, %s4, [#allocation6]
    $region25: #{tpu_custom_call.1} parent=1 // pred_fallthru
      _
    // Predicated region
    $region26: #{tpu_custom_call.1} parent=1 // pred_check
      _
    $region27: #{tpu_custom_call.1} parent=1 // pred_check_branch
      %276 = sbr.rel (0) target = $region29
    $region28: #{tpu_custom_call.1} parent=1 // pred_region
      %277 = dma.done [#allocation6], 512
    $region29: #{tpu_custom_call.1} parent=1 // pred_fallthru
      _
    %278 = vsyncpa [#allocation5], 1
    %279 = vsyncpa [#allocation8], 1
    %280 = vsyncpa [#allocation6], 1

</llo_original>
